<compile_context>
chip_gen: v5e
topology: v5e:2x2
jax: 0.10.0
libtpu: 0.0.40
codegen_flags: <defaults>
</compile_context>

<pallas_src>
import numpy as np
import jax
import jax.numpy as jnp
from jax.experimental import pallas as pl
from jax.experimental.pallas import tpu as pltpu


def _round_up(x, m):
    return ((x + m - 1) // m) * m


# ----------------------------------------------------------------------------
# Parameter construction (replicates librosa.filters.mel htk=True norm='slaney'
# and torch.hann_window periodic=True); deterministic numpy.
# ----------------------------------------------------------------------------
def _hz_to_mel_htk(f):
    return 2595.0 * np.log10(1.0 + np.asarray(f, dtype=np.float64) / 700.0)


def _mel_to_hz_htk(m):
    return 700.0 * (10.0 ** (np.asarray(m, dtype=np.float64) / 2595.0) - 1.0)


def make_mel_basis(sr, n_fft, n_mels, fmin=0.0, fmax=None):
    if fmax is None:
        fmax = sr / 2.0
    n_freq = n_fft // 2 + 1
    fftfreqs = np.linspace(0.0, sr / 2.0, n_freq)
    mel_pts = np.linspace(_hz_to_mel_htk(fmin), _hz_to_mel_htk(fmax), n_mels + 2)
    mel_f = _mel_to_hz_htk(mel_pts)
    fdiff = np.diff(mel_f)
    ramps = mel_f[:, None] - fftfreqs[None, :]
    lower = -ramps[:-2] / fdiff[:-1, None]
    upper = ramps[2:] / fdiff[1:, None]
    weights = np.maximum(0.0, np.minimum(lower, upper))
    enorm = 2.0 / (mel_f[2: n_mels + 2] - mel_f[:n_mels])   # slaney norm
    weights = weights * enorm[:, None]
    return weights.astype(np.float32)                        # [n_mels, n_freq]


def make_hann_window(win_length):
    n = np.arange(win_length, dtype=np.float64)
    return (0.5 - 0.5 * np.cos(2.0 * np.pi * n / win_length)).astype(np.float32)


def make_rdft_matrices(n_fft):
    n_freq = n_fft // 2 + 1
    n = np.arange(n_fft, dtype=np.float64)[:, None]
    k = np.arange(n_freq, dtype=np.float64)[None, :]
    ang = 2.0 * np.pi * n * k / n_fft
    cos_m = np.cos(ang)
    sin_m = -np.sin(ang)          # sign irrelevant for |.|
    return cos_m, sin_m           # [n_fft, n_freq] each (float64 until folded/cast)


# ----------------------------------------------------------------------------
# Pallas kernel: one [TILE_M, n_fft] tile of frames -> [TILE_M, n_mels_pad] log-mel
# ----------------------------------------------------------------------------
def _make_melspec_kernel(clamp, f_pad):
    def kernel(frames_ref, cossin_ref, melT_ref, out_ref):
        # One wide MXU matmul for the real DFT (re | im), f32 accumulation.
        re_im = jnp.dot(frames_ref[...], cossin_ref[...],
                        preferred_element_type=jnp.float32)     # [tm, 2*f_pad]
        re = re_im[:, :f_pad]                                   # 128-aligned split
        im = re_im[:, f_pad:]
        mag = jnp.sqrt(re * re + im * im)                       # f32 (VPU/EUP)
        mel = jnp.dot(mag.astype(melT_ref.dtype), melT_ref[...],
                      preferred_element_type=jnp.float32)       # [tm, n_mels_pad]
        out_ref[...] = jnp.log(jnp.maximum(mel, clamp))
    return kernel


# ----------------------------------------------------------------------------
# Module wrapper
# ----------------------------------------------------------------------------
class MelSpectrogramPallas:
    def __init__(self, n_mel_channels, sampling_rate, win_length, hop_length,
                 n_fft=None, mel_fmin=0.0, mel_fmax=None, clamp=1e-5,
                 compute_dtype=jnp.bfloat16, tile_m=512):
        n_fft = win_length if n_fft is None else n_fft
        self.n_fft = n_fft
        self.hop_length = hop_length
        self.win_length = win_length
        self.n_mel_channels = n_mel_channels
        self.clamp = float(clamp)
        self.compute_dtype = compute_dtype
        self.tile_m = tile_m

        n_freq = n_fft // 2 + 1
        self.n_freq = n_freq
        self.f_pad = _round_up(n_freq, 128)
        self.n_mels_pad = _round_up(n_mel_channels, 128)

        mel_basis = make_mel_basis(sampling_rate, n_fft, n_mel_channels, mel_fmin, mel_fmax)
        self.mel_basis = jnp.asarray(mel_basis)              # f32 (kept for reference math)

        # hann window, zero-padded to n_fft (centered) like torch.stft when win_length < n_fft
        win = make_hann_window(win_length).astype(np.float64)
        wfull = np.zeros(n_fft, dtype=np.float64)
        lp = (n_fft - win_length) // 2
        wfull[lp: lp + win_length] = win
        self.window_full = jnp.asarray(wfull.astype(np.float32))

        # window-folded real-DFT matrices, concatenated [cos | sin], lane-padded to 2*F_pad
        cos_m, sin_m = make_rdft_matrices(n_fft)
        cos_w = (cos_m * wfull[:, None]).astype(np.float32)
        sin_w = (sin_m * wfull[:, None]).astype(np.float32)
        cossin = np.zeros((n_fft, 2 * self.f_pad), dtype=np.float32)
        cossin[:, :n_freq] = cos_w
        cossin[:, self.f_pad: self.f_pad + n_freq] = sin_w

        # mel_basis^T padded to [F_pad, n_mels_pad]; zero rows/cols are inert
        melT = np.zeros((self.f_pad, self.n_mels_pad), dtype=np.float32)
        melT[:n_freq, :n_mel_channels] = mel_basis.T

        self.cossin = jnp.asarray(cossin, dtype=compute_dtype)   # [n_fft, 2*F_pad]
        self.melT = jnp.asarray(melT, dtype=compute_dtype)       # [F_pad, n_mels_pad]

    def __call__(self, audio, center=True):
        # audio: [B, L] float32
        B, L = audio.shape
        n_fft, hop = self.n_fft, self.hop_length

        if center:
            p = n_fft // 2
            audio = jnp.pad(audio, ((0, 0), (p, p)), mode="reflect")
        Lp = audio.shape[1]
        n_frames = 1 + (Lp - n_fft) // hop

        # TODO(synk): frame directly inside the kernel (manual DMA of overlapping audio
        # windows from an ANY-space ref) to avoid materializing the overlapped frames
        # array in HBM; kept as a JAX gather here, but already in bf16 to halve traffic.
        idx = (jnp.arange(n_frames)[:, None] * hop) + jnp.arange(n_fft)[None, :]
        frames = audio[:, idx].reshape(B * n_frames, n_fft).astype(self.compute_dtype)

        M = B * n_frames
        tile_m = min(self.tile_m, _round_up(M, 8))
        M_pad = _round_up(M, tile_m)
        if M_pad != M:
            frames = jnp.pad(frames, ((0, M_pad - M), (0, 0)))   # zero rows are inert

        grid = (M_pad // tile_m,)
        f_pad, n_mels_pad = self.f_pad, self.n_mels_pad
        itemsize = np.dtype(self.compute_dtype).itemsize

        flops = 2 * M_pad * n_fft * (2 * f_pad) + 2 * M_pad * f_pad * n_mels_pad
        transcendentals = M_pad * f_pad + M_pad * n_mels_pad          # sqrt + log
        bytes_accessed = (M_pad * n_fft * itemsize                    # frames
                          + n_fft * 2 * f_pad * itemsize              # cos|sin
                          + f_pad * n_mels_pad * itemsize             # melT
                          + M_pad * n_mels_pad * 4)                   # output

        # VMEM budget: double-buffered frames/out tiles + resident constants + f32 temps
        vmem_est = (2 * tile_m * n_fft * itemsize
                    + n_fft * 2 * f_pad * itemsize
                    + f_pad * n_mels_pad * itemsize
                    + 2 * tile_m * n_mels_pad * 4
                    + 4 * tile_m * 2 * f_pad * 4)
        vmem_limit = int(min(max(2 * vmem_est, 32 * 1024 * 1024), 48 * 1024 * 1024))

        out = pl.pallas_call(
            _make_melspec_kernel(self.clamp, f_pad),
            out_shape=jax.ShapeDtypeStruct((M_pad, n_mels_pad), jnp.float32),
            grid=grid,
            in_specs=[
                pl.BlockSpec((tile_m, n_fft), lambda i: (i, 0)),         # frame tile
                pl.BlockSpec((n_fft, 2 * f_pad), lambda i: (0, 0)),      # resident [cos|sin]
                pl.BlockSpec((f_pad, n_mels_pad), lambda i: (0, 0)),     # resident melT
            ],
            out_specs=pl.BlockSpec((tile_m, n_mels_pad), lambda i: (i, 0)),
            compiler_params=pltpu.CompilerParams(
                dimension_semantics=("parallel",),
                vmem_limit_bytes=vmem_limit),
            cost_estimate=pl.CostEstimate(
                flops=int(flops),
                transcendentals=int(transcendentals),
                bytes_accessed=int(bytes_accessed)),
        )(frames, self.cossin, self.melT)

        out = out[:M, :self.n_mel_channels].reshape(B, n_frames, self.n_mel_channels)
        return jnp.transpose(out, (0, 2, 1))    # [B, n_mels, T]  (matches torch)


# ----------------------------------------------------------------------------
# Pure-JAX f32 reference (rfft-based) for correctness checks
# ----------------------------------------------------------------------------
def reference_logmel(module, audio, center=True):
    n_fft, hop = module.n_fft, module.hop_length
    a = jnp.pad(audio, ((0, 0), (n_fft // 2, n_fft // 2)), mode="reflect") if center else audio
    n_frames = 1 + (a.shape[1] - n_fft) // hop
    idx = (jnp.arange(n_frames)[:, None] * hop) + jnp.arange(n_fft)[None, :]
    frames = a[:, idx] * module.window_full[None, None, :]           # [B, T, n_fft]
    mag = jnp.abs(jnp.fft.rfft(frames.astype(jnp.float32), axis=-1))  # [B, T, F]
    mel_out = jnp.einsum("mf,btf->bmt", module.mel_basis, mag)       # [B, n_mels, T]
    return jnp.log(jnp.maximum(mel_out, module.clamp))


if __name__ == "__main__":
    # small, deterministic config
    n_mel_channels = 16
    sampling_rate = 16000
    win_length = 64       # n_fft = 64 -> n_freq = 33 (padded to 128 lanes)
    hop_length = 16
    B, L = 2, 256

    key = jax.random.PRNGKey(0)
    audio = jax.random.normal(key, (B, L), dtype=jnp.float32)

    ref = None

    # 1) default performance config: bf16 MXU inputs, f32 accumulation
    mod_bf16 = MelSpectrogramPallas(n_mel_channels, sampling_rate, win_length, hop_length)
    out_bf16 = jax.block_until_ready(mod_bf16(audio))
    ref = jax.block_until_ready(reference_logmel(mod_bf16, audio))
    assert out_bf16.shape == ref.shape, (out_bf16.shape, ref.shape)
    # bf16 MXU inputs -> looser tolerance on the log-mel output
    np.testing.assert_allclose(np.asarray(out_bf16), np.asarray(ref), rtol=5e-2, atol=5e-2)

    # 2) f32 config for a tight check of the kernel math (same kernel, f32 operands)
    mod_f32 = MelSpectrogramPallas(n_mel_channels, sampling_rate, win_length, hop_length,
                                   compute_dtype=jnp.float32)
    out_f32 = jax.block_until_ready(mod_f32(audio))
    np.testing.assert_allclose(np.asarray(out_f32), np.asarray(ref), rtol=2e-3, atol=2e-3)

    print("KERNEL_OK")
</pallas_src>

<mosaic_0001>
module attributes {stable_mosaic.version = 11 : i64} {
  func.func @kernel(%arg0: i32, %arg1: memref<40x64xbf16, #tpu.memory_space<vmem>>, %arg2: memref<64x256xbf16, #tpu.memory_space<vmem>>, %arg3: memref<128x128xbf16, #tpu.memory_space<vmem>>, %arg4: memref<40x128xf32, #tpu.memory_space<vmem>>) attributes {dimension_semantics = [#tpu.dimension_semantics<parallel>], iteration_bounds = array<i64: 1>, scalar_prefetch = 0 : i64, scratch_operands = 0 : i64, tpu.core_type = #tpu.core_type<tc>, window_params = [{transform_indices = @transform_0, window_bounds = array<i64: 40, 64>}, {pipeline_mode = #tpu.pipeline_mode<synchronous>, transform_indices = @transform_1, window_bounds = array<i64: 64, 256>}, {pipeline_mode = #tpu.pipeline_mode<synchronous>, transform_indices = @transform_2, window_bounds = array<i64: 128, 128>}, {transform_indices = @transform_3, window_bounds = array<i64: 40, 128>}]} {
    %c0 = arith.constant 0 : index
    %c0_0 = arith.constant 0 : index
    %0 = vector.load %arg1[%c0, %c0_0] : memref<40x64xbf16, #tpu.memory_space<vmem>>, vector<40x64xbf16>
    %c0_1 = arith.constant 0 : index
    %c0_2 = arith.constant 0 : index
    %1 = vector.load %arg2[%c0_1, %c0_2] : memref<64x256xbf16, #tpu.memory_space<vmem>>, vector<64x256xbf16>
    %cst = arith.constant dense<0.000000e+00> : vector<40x256xf32>
    %2 = tpu.matmul %0, %1, %cst {dimension_numbers = #tpu.dot_dimension_numbers<[1], [0], [0], [1], [0, 0, 1, 1], [], []>} : vector<40x64xbf16>, vector<64x256xbf16>, vector<40x256xf32> -> vector<40x256xf32>
    %3 = vector.extract_strided_slice %2 {offsets = [0, 0], sizes = [40, 128], strides = [1, 1]} : vector<40x256xf32> to vector<40x128xf32>
    %4 = vector.extract_strided_slice %2 {offsets = [0, 128], sizes = [40, 128], strides = [1, 1]} : vector<40x256xf32> to vector<40x128xf32>
    %5 = arith.mulf %3, %3 : vector<40x128xf32>
    %6 = arith.mulf %4, %4 : vector<40x128xf32>
    %7 = arith.addf %5, %6 : vector<40x128xf32>
    %8 = math.sqrt %7 : vector<40x128xf32>
    %9 = arith.truncf %8 : vector<40x128xf32> to vector<40x128xbf16>
    %c0_3 = arith.constant 0 : index
    %c0_4 = arith.constant 0 : index
    %10 = vector.load %arg3[%c0_3, %c0_4] : memref<128x128xbf16, #tpu.memory_space<vmem>>, vector<128x128xbf16>
    %cst_5 = arith.constant dense<0.000000e+00> : vector<40x128xf32>
    %11 = tpu.matmul %9, %10, %cst_5 {dimension_numbers = #tpu.dot_dimension_numbers<[1], [0], [0], [1], [0, 0, 1, 1], [], []>} : vector<40x128xbf16>, vector<128x128xbf16>, vector<40x128xf32> -> vector<40x128xf32>
    %cst_6 = arith.constant 9.99999974E-6 : f32
    %12 = vector.broadcast %cst_6 : f32 to vector<40x128xf32>
    %13 = arith.maximumf %11, %12 : vector<40x128xf32>
    %14 = math.log %13 : vector<40x128xf32>
    %c0_7 = arith.constant 0 : index
    %c0_8 = arith.constant 0 : index
    %15 = vector.load %arg4[%c0_7, %c0_8] : memref<40x128xf32, #tpu.memory_space<vmem>>, vector<40x128xf32>
    tpu.vector_store %arg4[%c0_7, %c0_8], %14 {strides = array<i32>} : memref<40x128xf32, #tpu.memory_space<vmem>>, vector<40x128xf32>,
    return
  }
  func.func @transform_0(%arg0: i32) -> (i32, i32) {
    %c0_i32 = arith.constant 0 : i32
    %c0_i32_0 = arith.constant 0 : i32
    return %arg0, %c0_i32 : i32, i32
  }
  func.func @transform_1(%arg0: i32) -> (i32, i32) {
    %c0_i32 = arith.constant 0 : i32
    %c0_i32_0 = arith.constant 0 : i32
    %c0_i32_1 = arith.constant 0 : i32
    return %c0_i32, %c0_i32_0 : i32, i32
  }
  func.func @transform_2(%arg0: i32) -> (i32, i32) {
    %c0_i32 = arith.constant 0 : i32
    %c0_i32_0 = arith.constant 0 : i32
    %c0_i32_1 = arith.constant 0 : i32
    return %c0_i32, %c0_i32_0 : i32, i32
  }
  func.func @transform_3(%arg0: i32) -> (i32, i32) {
    %c0_i32 = arith.constant 0 : i32
    %c0_i32_0 = arith.constant 0 : i32
    return %arg0, %c0_i32 : i32, i32
  }
}

</mosaic_0001>

<llo_original>
// kernel: tpu_custom_call.1
$region0: #{tpu_custom_call.1}
  #allocation0 [shape = 'u32[]', space=smem, size = 0x4, offset = 0x4, fixed_abs, tag = 'smem constant byte address 0x4 - core index']
  #allocation1 [shape = 'u32[72,128]{1,0:T(1,128)}', space=vmem, size = 0x9000, scoped, tag = 'internal scratch']
  %s0 = inlined_call_operand.hbm [shape: bf16[40,64], index: 0, kind: input, shape index: {}]
  %s1 = inlined_call_operand.hbm [shape: bf16[64,256], index: 1, kind: input, shape index: {}]
  %s2 = inlined_call_operand.hbm [shape: bf16[128,128], index: 2, kind: input, shape index: {}]
  %s3 = inlined_call_operand.hbm [shape: f32[40,128], index: 3, kind: output, shape index: {}]
  %s4 = sld [smem:[#allocation0]]
  $region34: #{tpu_custom_call.1} parent=0
    _
  %s6 = ssub.s32 1, %s4
  %s7 = scalar_select 0, %s6, %s4
  $region1: #{tpu_custom_call.1} parent=0
    #allocation2 [shape = 'u8[10240]{0}', space=vmem, size = 0x2800, scoped, tag = 'input window, operand 0, single buffered']
    #allocation3 [shape = 's32[1]{0}', space=sflag, size = 0x4, scoped, tag = 'scoped memory for tpu_custom_call.1']
    #allocation4 [shape = 's32[1]{0}', space=sflag, size = 0x4, scoped, tag = 'scoped memory for tpu_custom_call.1']
    #allocation5 [shape = 'u8[32768]{0}', space=vmem, size = 0x8000, scoped, tag = 'input window, operand 1, single buffered']
    #allocation6 [shape = 's32[1]{0}', space=sflag, size = 0x4, scoped, tag = 'scoped memory for tpu_custom_call.1']
    #allocation7 [shape = 'u8[32768]{0}', space=vmem, size = 0x8000, scoped, tag = 'input window, operand 2, single buffered']
    #allocation8 [shape = 'u8[20480]{0}', space=vmem, size = 0x5000, scoped, tag = 'output window, operand 0, single buffered']
    %8 = vsyncpa [#allocation3], 0
    %9 = vsyncpa [#allocation6], 0
    %10 = vsyncpa [#allocation4], 0
    // Predicated region
    $region2: #{tpu_custom_call.1} parent=1 // pred_check
      _
    $region3: #{tpu_custom_call.1} parent=1 // pred_check_branch
      %12 = sbr.rel (0) target = $region5
    $region4: #{tpu_custom_call.1} parent=1 // pred_region
      %14 = vsyncadd [#allocation3], 0
      %s15 = sshll.u32 %s0, 4
      %s16 = int_to_ptr.hbm [resolvable:$true] %s15
      %s17 = sshll.u32 [#allocation2], 4
      %s18 = int_to_ptr.vmem [resolvable:$true] %s17
      %23 = dma.hbm_to_vmem [thread:$0]  %s16, 320, %s18, [#allocation3], 64, 64, 4
    $region5: #{tpu_custom_call.1} parent=1 // pred_fallthru
      _
    // Predicated region
    $region6: #{tpu_custom_call.1} parent=1 // pred_check
      _
    $region7: #{tpu_custom_call.1} parent=1 // pred_check_branch
      %25 = sbr.rel (0) target = $region9
    $region8: #{tpu_custom_call.1} parent=1 // pred_region
      %27 = vsyncadd [#allocation6], 0
      %s28 = sshll.u32 %s1, 4
      %s29 = int_to_ptr.hbm [resolvable:$true] %s28
      %s30 = sshll.u32 [#allocation5], 4
      %s31 = int_to_ptr.vmem [resolvable:$true] %s30
      %36 = dma.hbm_to_vmem [thread:$0]  %s29, 1024, %s31, [#allocation6], 128, 128, 8
    $region9: #{tpu_custom_call.1} parent=1 // pred_fallthru
      _
    // Predicated region
    $region10: #{tpu_custom_call.1} parent=1 // pred_check
      _
    $region11: #{tpu_custom_call.1} parent=1 // pred_check_branch
      %38 = sbr.rel (0) target = $region13
    $region12: #{tpu_custom_call.1} parent=1 // pred_region
      %40 = vsyncadd [#allocation6], 0
      %s41 = sshll.u32 %s2, 4
      %s42 = int_to_ptr.hbm [resolvable:$true] %s41
      %s43 = sshll.u32 [#allocation7], 4
      %s44 = int_to_ptr.vmem [resolvable:$true] %s43
      %49 = dma.hbm_to_vmem [thread:$0]  %s42, 1024, %s44, [#allocation6], 64, 64, 4
    $region13: #{tpu_custom_call.1} parent=1 // pred_fallthru
      _
    // Predicated region
    $region14: #{tpu_custom_call.1} parent=1 // pred_check
      _
    $region15: #{tpu_custom_call.1} parent=1 // pred_check_branch
      %51 = sbr.rel (0) target = $region17
    $region16: #{tpu_custom_call.1} parent=1 // pred_region
      %53 = dma.done [#allocation3], 320
    $region17: #{tpu_custom_call.1} parent=1 // pred_fallthru
      _
    // Predicated region
    $region18: #{tpu_custom_call.1} parent=1 // pred_check
      _
    $region19: #{tpu_custom_call.1} parent=1 // pred_check_branch
      %55 = sbr.rel (0) target = $region21
    $region20: #{tpu_custom_call.1} parent=1 // pred_region
      %57 = dma.done [#allocation6], 1024
    $region21: #{tpu_custom_call.1} parent=1 // pred_fallthru
      _
    // Predicated region
    $region22: #{tpu_custom_call.1} parent=1 // pred_check
      _
    $region23: #{tpu_custom_call.1} parent=1 // pred_check_branch
      %59 = sbr.rel (0) target = $region25
    $region24: #{tpu_custom_call.1} parent=1 // pred_region
      %61 = dma.done [#allocation6], 1024
    $region25: #{tpu_custom_call.1} parent=1 // pred_fallthru
      _
    %v63 = vld [vmem:[#allocation2] sm:$0xf]
    %v64 = vld [vmem:[#allocation2 + $0x4] sm:$0xf]
    %v65 = vld [vmem:[#allocation2 + $0x8] sm:$0xf]
    %v66 = vld [vmem:[#allocation2 + $0xc] sm:$0xf]
    %v67 = vld [vmem:[#allocation2 + $0x10] sm:$0xf]
    %v68 = vld [vmem:[#allocation5] sm:$0xff]
    %v69 = vld [vmem:[#allocation5 + $0x8] sm:$0xff]
    %v70 = vld [vmem:[#allocation5 + $0x10] sm:$0xff]
    %v71 = vld [vmem:[#allocation5 + $0x18] sm:$0xff]
    %v72 = vld [vmem:[#allocation5 + $0x20] sm:$0xff]
    %v73 = vld [vmem:[#allocation5 + $0x28] sm:$0xff]
    %v74 = vld [vmem:[#allocation5 + $0x30] sm:$0xff]
    %v75 = vld [vmem:[#allocation5 + $0x38] sm:$0xff]
    %v81 = vunpack.c.l.b16 %v63
    %v82 = vunpack.c.l.b16 %v64
    %v83 = vunpack.c.l.b16 %v65
    %v84 = vunpack.c.l.b16 %v66
    %v85 = vunpack.c.l.b16 %v67
    %v86 = vpack.c.b16 %v82, %v81
    %v87 = vpack.c.b16 %v84, %v83
    %v88 = vpack.c.b16 %v85, %v85
    %v97 = vunpack.c.l.b16 %v68
    %v98 = vunpack.c.h.b16 %v68
    %v99 = vunpack.c.l.b16 %v69
    %v100 = vunpack.c.h.b16 %v69
    %v101 = vunpack.c.l.b16 %v70
    %v102 = vunpack.c.h.b16 %v70
    %v103 = vunpack.c.l.b16 %v71
    %v104 = vunpack.c.h.b16 %v71
    %v105 = vunpack.c.l.b16 %v72
    %v106 = vunpack.c.h.b16 %v72
    %v107 = vunpack.c.l.b16 %v73
    %v108 = vunpack.c.h.b16 %v73
    %v109 = vunpack.c.l.b16 %v74
    %v110 = vunpack.c.h.b16 %v74
    %v111 = vunpack.c.l.b16 %v75
    %v112 = vunpack.c.h.b16 %v75
    %v113 = vpack.c.b16 %v99, %v97
    %v114 = vpack.c.b16 %v100, %v98
    %v115 = vpack.c.b16 %v103, %v101
    %v116 = vpack.c.b16 %v104, %v102
    %v117 = vpack.c.b16 %v107, %v105
    %v118 = vpack.c.b16 %v108, %v106
    %v119 = vpack.c.b16 %v111, %v109
    %v120 = vpack.c.b16 %v112, %v110
    %vm129 = vcmask 523264
    %v131 = vsel %vm129, %v86, 0
    %v134 = vsel %vm129, %v87, 0
    %v137 = vsel %vm129, %v88, 0
    %139 = vmatpush.bf16.msra.mxu0 0
    %140 = vmatpush.bf16.msra.mxu0 0
    %141 = vmatpush.bf16.msra.mxu0 0
    %142 = vmatpush.bf16.msra.mxu0 0
    %143 = vmatpush.bf16.msra.mxu0 %v119
    %144 = vmatpush.bf16.msra.mxu0 %v117
    %145 = vmatpush.bf16.msra.mxu0 %v115
    %146 = vmatpush.bf16.msra.mxu0 %v113
    %147 = vmatmul.bf16.gmra.mxu0 %v131
    %v148 = vpop.f32.mrf.mxu0
    %v149 = vadd.f32 0.0, %v148
    %v150 = vpop.f32.mrf.mxu0
    %v151 = vadd.f32 0.0, %v150
    %152 = vmatmul.bf16.gmra.mxu0 %v134
    %v153 = vpop.f32.mrf.mxu0
    %v154 = vadd.f32 0.0, %v153
    %v155 = vpop.f32.mrf.mxu0
    %v156 = vadd.f32 0.0, %v155
    %157 = vmatmul.bf16.gmra.mxu0 %v137
    %v158 = vpop.f32.mrf.mxu0
    %v159 = vadd.f32 0.0, %v158
    %v160 = vpop.f32.mrf.mxu0
    %161 = vdwg.mxu0
    %162 = vmatpush.bf16.msra.mxu0 0
    %163 = vmatpush.bf16.msra.mxu0 0
    %164 = vmatpush.bf16.msra.mxu0 0
    %165 = vmatpush.bf16.msra.mxu0 0
    %166 = vmatpush.bf16.msra.mxu0 %v120
    %167 = vmatpush.bf16.msra.mxu0 %v118
    %168 = vmatpush.bf16.msra.mxu0 %v116
    %169 = vmatpush.bf16.msra.mxu0 %v114
    %170 = vmatmul.bf16.gmra.mxu0 %v131
    %v171 = vpop.f32.mrf.mxu0
    %v172 = vadd.f32 0.0, %v171
    %v173 = vpop.f32.mrf.mxu0
    %v174 = vadd.f32 0.0, %v173
    %175 = vmatmul.bf16.gmra.mxu0 %v134
    %v176 = vpop.f32.mrf.mxu0
    %v177 = vadd.f32 0.0, %v176
    %v178 = vpop.f32.mrf.mxu0
    %v179 = vadd.f32 0.0, %v178
    %180 = vmatmul.bf16.gmra.mxu0 %v137
    %v181 = vpop.f32.mrf.mxu0
    %v182 = vadd.f32 0.0, %v181
    %v183 = vpop.f32.mrf.mxu0
    %184 = vdwg.mxu0
    %v185 = vmul.f32 %v149, %v149
    %v186 = vmul.f32 %v151, %v151
    %v187 = vmul.f32 %v154, %v154
    %v188 = vmul.f32 %v156, %v156
    %v189 = vmul.f32 %v159, %v159
    %v190 = vmul.f32 %v172, %v172
    %v191 = vmul.f32 %v174, %v174
    %v192 = vmul.f32 %v177, %v177
    %v193 = vmul.f32 %v179, %v179
    %v194 = vmul.f32 %v182, %v182
    %v195 = vadd.f32 %v185, %v190
    %v196 = vadd.f32 %v186, %v191
    %v197 = vadd.f32 %v187, %v192
    %v198 = vadd.f32 %v188, %v193
    %v199 = vadd.f32 %v189, %v194
    %v200 = vrsqrt.pop %v195
    %v201 = vmul.f32 %v200, %v195
    %v202 = vmul.f32 %v201, %v200
    %v203 = vmul.f32 0.5, %v202
    %v204 = vsub.f32 1.5, %v203
    %v205 = vmul.f32 %v200, %v204
    %v206 = vmul.f32 %v195, %v205
    %vm207 = vcmp.eq.f32.partialorder %v195, inf
    %v208 = vsel %vm207, %v195, %v206
    %vm209 = vcmp.eq.f32.partialorder %v195, 0.0
    %v210 = vand.u32 %v195, 2147483648
    %v211 = vsel %vm209, %v210, %v208
    %v212 = vrsqrt.pop %v196
    %v213 = vmul.f32 %v212, %v196
    %v214 = vmul.f32 %v213, %v212
    %v215 = vmul.f32 0.5, %v214
    %v216 = vsub.f32 1.5, %v215
    %v217 = vmul.f32 %v212, %v216
    %v218 = vmul.f32 %v196, %v217
    %vm219 = vcmp.eq.f32.partialorder %v196, inf
    %v220 = vsel %vm219, %v196, %v218
    %vm221 = vcmp.eq.f32.partialorder %v196, 0.0
    %v222 = vand.u32 %v196, 2147483648
    %v223 = vsel %vm221, %v222, %v220
    %v224 = vrsqrt.pop %v197
    %v225 = vmul.f32 %v224, %v197
    %v226 = vmul.f32 %v225, %v224
    %v227 = vmul.f32 0.5, %v226
    %v228 = vsub.f32 1.5, %v227
    %v229 = vmul.f32 %v224, %v228
    %v230 = vmul.f32 %v197, %v229
    %vm231 = vcmp.eq.f32.partialorder %v197, inf
    %v232 = vsel %vm231, %v197, %v230
    %vm233 = vcmp.eq.f32.partialorder %v197, 0.0
    %v234 = vand.u32 %v197, 2147483648
    %v235 = vsel %vm233, %v234, %v232
    %v236 = vrsqrt.pop %v198
    %v237 = vmul.f32 %v236, %v198
    %v238 = vmul.f32 %v237, %v236
    %v239 = vmul.f32 0.5, %v238
    %v240 = vsub.f32 1.5, %v239
    %v241 = vmul.f32 %v236, %v240
    %v242 = vmul.f32 %v198, %v241
    %vm243 = vcmp.eq.f32.partialorder %v198, inf
    %v244 = vsel %vm243, %v198, %v242
    %vm245 = vcmp.eq.f32.partialorder %v198, 0.0
    %v246 = vand.u32 %v198, 2147483648
    %v247 = vsel %vm245, %v246, %v244
    %v248 = vrsqrt.pop %v199
    %v249 = vmul.f32 %v248, %v199
    %v250 = vmul.f32 %v249, %v248
    %v251 = vmul.f32 0.5, %v250
    %v252 = vsub.f32 1.5, %v251
    %v253 = vmul.f32 %v248, %v252
    %v254 = vmul.f32 %v199, %v253
    %vm255 = vcmp.eq.f32.partialorder %v199, inf
    %v256 = vsel %vm255, %v199, %v254
    %vm257 = vcmp.eq.f32.partialorder %v199, 0.0
    %v258 = vand.u32 %v199, 2147483648
    %v259 = vsel %vm257, %v258, %v256
    %v260 = vpack.c.bf16 %v223, %v211
    %v261 = vpack.c.bf16 %v247, %v235
    %v262 = vpack.c.bf16 %v259, %v259
    %v263 = vld [vmem:[#allocation7] sm:$0xf]
    %v264 = vld [vmem:[#allocation7 + $0x4] sm:$0xf]
    %v265 = vld [vmem:[#allocation7 + $0x8] sm:$0xf]
    %v266 = vld [vmem:[#allocation7 + $0xc] sm:$0xf]
    %v267 = vld [vmem:[#allocation7 + $0x10] sm:$0xf]
    %v268 = vld [vmem:[#allocation7 + $0x14] sm:$0xf]
    %v269 = vld [vmem:[#allocation7 + $0x18] sm:$0xf]
    %v270 = vld [vmem:[#allocation7 + $0x1c] sm:$0xf]
    %v271 = vld [vmem:[#allocation7 + $0x20] sm:$0xf]
    %v272 = vld [vmem:[#allocation7 + $0x24] sm:$0xf]
    %v273 = vld [vmem:[#allocation7 + $0x28] sm:$0xf]
    %v274 = vld [vmem:[#allocation7 + $0x2c] sm:$0xf]
    %v275 = vld [vmem:[#allocation7 + $0x30] sm:$0xf]
    %v276 = vld [vmem:[#allocation7 + $0x34] sm:$0xf]
    %v277 = vld [vmem:[#allocation7 + $0x38] sm:$0xf]
    %v278 = vld [vmem:[#allocation7 + $0x3c] sm:$0xf]
    %v295 = vunpack.c.l.b16 %v263
    %v296 = vunpack.c.l.b16 %v264
    %v297 = vunpack.c.l.b16 %v265
    %v298 = vunpack.c.l.b16 %v266
    %v299 = vunpack.c.l.b16 %v267
    %v300 = vunpack.c.l.b16 %v268
    %v301 = vunpack.c.l.b16 %v269
    %v302 = vunpack.c.l.b16 %v270
    %v303 = vunpack.c.l.b16 %v271
    %v304 = vunpack.c.l.b16 %v272
    %v305 = vunpack.c.l.b16 %v273
    %v306 = vunpack.c.l.b16 %v274
    %v307 = vunpack.c.l.b16 %v275
    %v308 = vunpack.c.l.b16 %v276
    %v309 = vunpack.c.l.b16 %v277
    %v310 = vunpack.c.l.b16 %v278
    %v311 = vpack.c.b16 %v296, %v295
    %v312 = vpack.c.b16 %v298, %v297
    %v313 = vpack.c.b16 %v300, %v299
    %v314 = vpack.c.b16 %v302, %v301
    %v315 = vpack.c.b16 %v304, %v303
    %v316 = vpack.c.b16 %v306, %v305
    %v317 = vpack.c.b16 %v308, %v307
    %v318 = vpack.c.b16 %v310, %v309
    %327 = vmatpush.bf16.msra.mxu0 %v318
    %328 = vmatpush.bf16.msra.mxu0 %v317
    %329 = vmatpush.bf16.msra.mxu0 %v316
    %330 = vmatpush.bf16.msra.mxu0 %v315
    %331 = vmatpush.bf16.msra.mxu0 %v314
    %332 = vmatpush.bf16.msra.mxu0 %v313
    %333 = vmatpush.bf16.msra.mxu0 %v312
    %334 = vmatpush.bf16.msra.mxu0 %v311
    %335 = vmatmul.bf16.gmra.mxu0 %v260
    %v336 = vpop.f32.mrf.mxu0
    %v337 = vadd.f32 0.0, %v336
    %v338 = vpop.f32.mrf.mxu0
    %v339 = vadd.f32 0.0, %v338
    %340 = vmatmul.bf16.gmra.mxu0 %v261
    %v341 = vpop.f32.mrf.mxu0
    %v342 = vadd.f32 0.0, %v341
    %v343 = vpop.f32.mrf.mxu0
    %v344 = vadd.f32 0.0, %v343
    %345 = vmatmul.bf16.gmra.mxu0 %v262
    %v346 = vpop.f32.mrf.mxu0
    %v347 = vadd.f32 0.0, %v346
    %v348 = vpop.f32.mrf.mxu0
    %349 = vdwg.mxu0
    %v350 = vmax.f32 %v337, 1e-05
    %v351 = vmax.f32 %v339, 1e-05
    %v352 = vmax.f32 %v342, 1e-05
    %v353 = vmax.f32 %v344, 1e-05
    %v354 = vmax.f32 %v347, 1e-05
    %v355 = vlog2.pop %v350
    %v356 = vmul.f32 %v355, 0.6931472
    %v357 = vlog2.pop %v351
    %v358 = vmul.f32 %v357, 0.6931472
    %v359 = vlog2.pop %v352
    %v360 = vmul.f32 %v359, 0.6931472
    %v361 = vlog2.pop %v353
    %v362 = vmul.f32 %v361, 0.6931472
    %v363 = vlog2.pop %v354
    %v364 = vmul.f32 %v363, 0.6931472
    %365 = vst [vmem:[#allocation8] sm:$0xff] %v356
    %366 = vst [vmem:[#allocation8 + $0x8] sm:$0xff] %v358
    %367 = vst [vmem:[#allocation8 + $0x10] sm:$0xff] %v360
    %368 = vst [vmem:[#allocation8 + $0x18] sm:$0xff] %v362
    %369 = vst [vmem:[#allocation8 + $0x20] sm:$0xff] %v364
    // Predicated region
    $region26: #{tpu_custom_call.1} parent=1 // pred_check
      _
    $region27: #{tpu_custom_call.1} parent=1 // pred_check_branch
      %371 = sbr.rel (0) target = $region29
    $region28: #{tpu_custom_call.1} parent=1 // pred_region
      %373 = vsyncadd [#allocation4], 0
      %s374 = sshll.u32 [#allocation8], 4
      %s375 = int_to_ptr.vmem [resolvable:$true] %s374
      %s376 = sshll.u32 %s3, 4
      %s377 = int_to_ptr.hbm [resolvable:$true] %s376
      %382 = dma.vmem_to_hbm [thread:$0]  %s375, 640, %s377, [#allocation4], 128, 128, 8
    $region29: #{tpu_custom_call.1} parent=1 // pred_fallthru
      _
    // Predicated region
    $region30: #{tpu_custom_call.1} parent=1 // pred_check
      _
    $region31: #{tpu_custom_call.1} parent=1 // pred_check_branch
      %384 = sbr.rel (0) target = $region33
    $region32: #{tpu_custom_call.1} parent=1 // pred_region
      %386 = dma.done [#allocation4], 640
    $region33: #{tpu_custom_call.1} parent=1 // pred_fallthru
      _
    %387 = vsyncpa [#allocation3], 1
    %388 = vsyncpa [#allocation6], 1
    %389 = vsyncpa [#allocation4], 1

</llo_original>
